<compile_context>
chip_gen: v7x
topology: tpu7x:2x2x1
jax: 0.10.0
libtpu: 0.0.40
codegen_flags: <defaults>
</compile_context>

<pallas_src>
import jax
import jax.numpy as jnp
from jax.experimental import pallas as pl
from jax.experimental.pallas import tpu as pltpu

_PAD_BIAS = -1e30  # large-negative bias for padded class columns -> exp() == 0


def smr_kernel(x_ref, w_ref, b_ref, log_ref, prob_ref, acc_ref):
    """Grid = (batch tiles, K tiles).  acc_ref is a resident f32 accumulator."""
    k = pl.program_id(1)

    @pl.when(k == 0)
    def _init():
        acc_ref[...] = jnp.zeros_like(acc_ref)

    # MXU matmul: bf16 operands, f32 accumulation.
    acc_ref[...] += jnp.dot(x_ref[...], w_ref[...],
                            preferred_element_type=jnp.float32)

    @pl.when(k == pl.num_programs(1) - 1)
    def _epilogue():
        logits = acc_ref[...] + b_ref[...].astype(jnp.float32)    # (tb, C_pad)
        # Numerically stable row softmax.  Padded columns carry -1e30 logits,
        # so they contribute exp(...) == 0 and never win the max.
        m = jnp.max(logits, axis=1, keepdims=True)
        e = jnp.exp(logits - m)
        denom = jnp.sum(e, axis=1, keepdims=True)
        inv = pl.reciprocal(denom, approx=True)      # EUP vrcp (free slot)
        inv = inv * (2.0 - denom * inv)              # one NR step -> ~f32 accurate
        log_ref[...] = logits.astype(log_ref.dtype)
        prob_ref[...] = (e * inv).astype(prob_ref.dtype)


def _round_up(x, m):
    return (x + m - 1) // m * m


def _choose_tiles(B, F, C_pad, budget_bytes):
    """Pick (tb, tk, est_vmem_bytes) so double-buffered tiles fit the budget."""
    # K tile: stream W over the feature axis when F is 128-tileable; otherwise
    # a single K step keeps the whole (F, C_pad) W slab resident.
    tk = F
    if F > 128:
        for cand in (1024, 512, 256, 128):
            if F % cand == 0:
                tk = cand
                break
    # Per-step VMEM footprint (2-deep pipelining on inputs/outputs):
    #   x  (bf16): 2*tb*tk*2        W (bf16): 2*tk*C_pad*2
    #   log/prob (f32): 2*2*tb*C_pad*4        acc scratch (f32): tb*C_pad*4
    fixed = 2 * tk * C_pad * 2 + 2 * C_pad * 4
    per_tb = 2 * tk * 2 + 2 * 2 * C_pad * 4 + C_pad * 4
    tb = max(8, (budget_bytes - fixed) // per_tb // 8 * 8)
    tb = min(512, tb, _round_up(B, 8))   # >=512 rows already ~HBM roofline
    return tb, tk, fixed + tb * per_tb


def smr_forward(x, w, b, *, out_dtype=jnp.float32, vmem_budget_bytes=24 << 20):
    """x: (B, F), w: (F, C), b: (C,) -> (log, prob), both (B, C)."""
    B, F = x.shape
    C = w.shape[1]

    # Lane-dense class axis (dense 128-lane output stores); 256-align when the
    # problem is big enough to be MXU-bound on v6e/v7x (2x256x256 MXU).
    lane = 256 if F >= 1024 else 128
    C_pad = _round_up(C, lane)

    tb, tk, est_vmem = _choose_tiles(B, F, C_pad, vmem_budget_bytes)
    nb = pl.cdiv(B, tb)     # partial last batch tile: OOB rows never written
    nk = F // tk            # tk divides F by construction

    # bf16 operands for the MXU; f32 accumulation happens inside the kernel.
    x_bf = x.astype(jnp.bfloat16)
    w_bf = w.astype(jnp.bfloat16)
    if C_pad != C:
        w_bf = jnp.pad(w_bf, ((0, 0), (0, C_pad - C)))
    b_p = b.reshape(1, C).astype(jnp.float32)
    if C_pad != C:
        b_p = jnp.pad(b_p, ((0, 0), (0, C_pad - C)), constant_values=_PAD_BIAS)

    vmem_limit = max(32 << 20, int(est_vmem * 5 // 4))

    log_p, prob_p = pl.pallas_call(
        smr_kernel,
        out_shape=(
            jax.ShapeDtypeStruct((B, C_pad), out_dtype),
            jax.ShapeDtypeStruct((B, C_pad), out_dtype),
        ),
        grid=(nb, nk),
        in_specs=[
            pl.BlockSpec((tb, tk), lambda i, k: (i, k)),      # x: batch+K tiled
            pl.BlockSpec((tk, C_pad), lambda i, k: (k, 0)),   # W: streamed over K
            pl.BlockSpec((1, C_pad), lambda i, k: (0, 0)),    # bias: resident
        ],
        out_specs=(
            pl.BlockSpec((tb, C_pad), lambda i, k: (i, 0)),
            pl.BlockSpec((tb, C_pad), lambda i, k: (i, 0)),
        ),
        scratch_shapes=[pltpu.VMEM((tb, C_pad), jnp.float32)],
        compiler_params=pltpu.CompilerParams(
            dimension_semantics=("parallel", "arbitrary"),
            vmem_limit_bytes=vmem_limit,
        ),
    )(x_bf, w_bf, b_p)

    # Strip class padding only (no batch padding was ever materialized).
    return log_p[:, :C], prob_p[:, :C]


# NOTE: the PyTorch forward's `x = self.droput(a)` line is after the return and
# therefore unreachable; dropout is intentionally not applied.
# TODO(synk): dropout layer is dead code in the reference forward; nothing else to translate.


if __name__ == "__main__":
    # Iris-like shapes: features=4, classes=3, batch=8
    features, classes, batch = 4, 3, 8

    key = jax.random.PRNGKey(0)
    kx, kw, kb = jax.random.split(key, 3)

    x = jax.random.normal(kx, (batch, features), dtype=jnp.float32)
    # nn.Linear(features, classes): weight (classes, features), bias (classes,)
    bound = 1.0 / jnp.sqrt(jnp.float32(features))
    w_torch = jax.random.uniform(kw, (classes, features), jnp.float32, -bound, bound)
    b_torch = jax.random.uniform(kb, (classes,), jnp.float32, -bound, bound)

    w = w_torch.T  # (features, classes) for x @ W

    log, prob = smr_forward(x, w, b_torch)
    jax.block_until_ready((log, prob))

    # Tight reference using the same bf16-rounded operands (kernel accumulates f32).
    x_r = x.astype(jnp.bfloat16).astype(jnp.float32)
    w_r = w.astype(jnp.bfloat16).astype(jnp.float32)
    log_ref = x_r @ w_r + b_torch[None, :]
    prob_ref = jax.nn.softmax(log_ref, axis=1)
    # Loose sanity check against the full-f32 math.
    log_ref_f32 = x @ w + b_torch[None, :]

    assert log.shape == (batch, classes) and prob.shape == (batch, classes)
    assert jnp.allclose(log, log_ref, atol=1e-4), "logits mismatch (bf16-operand ref)"
    assert jnp.allclose(prob, prob_ref, atol=1e-4), "softmax mismatch (bf16-operand ref)"
    assert jnp.allclose(log, log_ref_f32, atol=5e-2), "logits far from f32 reference"

    print("KERNEL_OK")
</pallas_src>

<mosaic_0001>
module attributes {stable_mosaic.version = 11 : i64} {
  func.func @smr_kernel(%arg0: i32, %arg1: i32, %arg2: memref<8x4xbf16, #tpu.memory_space<vmem>>, %arg3: memref<4x128xbf16, #tpu.memory_space<vmem>>, %arg4: memref<1x128xf32, #tpu.memory_space<vmem>>, %arg5: memref<8x128xf32, #tpu.memory_space<vmem>>, %arg6: memref<8x128xf32, #tpu.memory_space<vmem>>, %arg7: memref<8x128xf32, #tpu.memory_space<vmem>>) attributes {dimension_semantics = [#tpu.dimension_semantics<parallel>, #tpu.dimension_semantics<arbitrary>], iteration_bounds = array<i64: 1, 1>, scalar_prefetch = 0 : i64, scratch_operands = 1 : i64, tpu.core_type = #tpu.core_type<tc>, window_params = [{transform_indices = @transform_0, window_bounds = array<i64: 8, 4>}, {transform_indices = @transform_1, window_bounds = array<i64: 4, 128>}, {pipeline_mode = #tpu.pipeline_mode<synchronous>, transform_indices = @transform_2, window_bounds = array<i64: 1, 128>}, {transform_indices = @transform_3, window_bounds = array<i64: 8, 128>}, {transform_indices = @transform_4, window_bounds = array<i64: 8, 128>}]} {
    %c0_i32 = arith.constant 0 : i32
    %0 = arith.cmpi eq, %arg1, %c0_i32 : i32
    %1 = arith.extui %0 : i1 to i32
    %c0_i32_0 = arith.constant 0 : i32
    %2 = arith.cmpi ne, %1, %c0_i32_0 : i32
    scf.if %2 {
      %cst_10 = arith.constant 0.000000e+00 : f32
      %12 = vector.broadcast %cst_10 : f32 to vector<8x128xf32>
      %c0_11 = arith.constant 0 : index
      %c0_12 = arith.constant 0 : index
      %13 = vector.load %arg7[%c0_11, %c0_12] : memref<8x128xf32, #tpu.memory_space<vmem>>, vector<8x128xf32>
      tpu.vector_store %arg7[%c0_11, %c0_12], %12 {strides = array<i32>} : memref<8x128xf32, #tpu.memory_space<vmem>>, vector<8x128xf32>,
    } else {
    }
    %c0 = arith.constant 0 : index
    %c0_1 = arith.constant 0 : index
    %3 = vector.load %arg7[%c0, %c0_1] : memref<8x128xf32, #tpu.memory_space<vmem>>, vector<8x128xf32>
    %c0_2 = arith.constant 0 : index
    %c0_3 = arith.constant 0 : index
    %4 = vector.load %arg2[%c0_2, %c0_3] : memref<8x4xbf16, #tpu.memory_space<vmem>>, vector<8x4xbf16>
    %c0_4 = arith.constant 0 : index
    %c0_5 = arith.constant 0 : index
    %5 = vector.load %arg3[%c0_4, %c0_5] : memref<4x128xbf16, #tpu.memory_space<vmem>>, vector<4x128xbf16>
    %cst = arith.constant dense<0.000000e+00> : vector<8x128xf32>
    %6 = tpu.matmul %4, %5, %cst {dimension_numbers = #tpu.dot_dimension_numbers<[1], [0], [0], [1], [0, 0, 1, 1], [], []>} : vector<8x4xbf16>, vector<4x128xbf16>, vector<8x128xf32> -> vector<8x128xf32>
    %7 = arith.addf %3, %6 : vector<8x128xf32>
    %c0_6 = arith.constant 0 : index
    %c0_7 = arith.constant 0 : index
    %8 = vector.load %arg7[%c0_6, %c0_7] : memref<8x128xf32, #tpu.memory_space<vmem>>, vector<8x128xf32>
    tpu.vector_store %arg7[%c0_6, %c0_7], %7 {strides = array<i32>} : memref<8x128xf32, #tpu.memory_space<vmem>>, vector<8x128xf32>,
    %c0_i32_8 = arith.constant 0 : i32
    %9 = arith.cmpi eq, %arg1, %c0_i32_8 : i32
    %10 = arith.extui %9 : i1 to i32
    %c0_i32_9 = arith.constant 0 : i32
    %11 = arith.cmpi ne, %10, %c0_i32_9 : i32
    scf.if %11 {
      %c0_10 = arith.constant 0 : index
      %c0_11 = arith.constant 0 : index
      %12 = vector.load %arg7[%c0_10, %c0_11] : memref<8x128xf32, #tpu.memory_space<vmem>>, vector<8x128xf32>
      %c0_12 = arith.constant 0 : index
      %c0_13 = arith.constant 0 : index
      %13 = vector.load %arg4[%c0_12, %c0_13] : memref<1x128xf32, #tpu.memory_space<vmem>>, vector<1x128xf32>
      %14 = vector.broadcast %13 : vector<1x128xf32> to vector<8x128xf32>
      %15 = arith.addf %12, %14 : vector<8x128xf32>
      %cst_14 = arith.constant dense<0xFF800000> : vector<8xf32>
      %16 = vector.multi_reduction <maximumf>, %15, %cst_14 [1] : vector<8x128xf32> to vector<8xf32>
      %17 = vector.shape_cast %16 : vector<8xf32> to vector<8x1xf32>
      %18 = vector.broadcast %17 : vector<8x1xf32> to vector<8x128xf32>
      %19 = arith.subf %15, %18 : vector<8x128xf32>
      %20 = math.exp %19 : vector<8x128xf32>
      %cst_15 = arith.constant dense<0.000000e+00> : vector<8xf32>
      %21 = vector.multi_reduction <add>, %20, %cst_15 [1] : vector<8x128xf32> to vector<8xf32>
      %22 = vector.shape_cast %21 : vector<8xf32> to vector<8x1xf32>
      %23 = tpu.reciprocal %22 {approx = true} : vector<8x1xf32> -> vector<8x1xf32>
      %24 = arith.mulf %22, %23 : vector<8x1xf32>
      %cst_16 = arith.constant 2.000000e+00 : f32
      %25 = vector.broadcast %cst_16 : f32 to vector<8x1xf32>
      %26 = arith.subf %25, %24 : vector<8x1xf32>
      %27 = arith.mulf %23, %26 : vector<8x1xf32>
      %c0_17 = arith.constant 0 : index
      %c0_18 = arith.constant 0 : index
      %28 = vector.load %arg5[%c0_17, %c0_18] : memref<8x128xf32, #tpu.memory_space<vmem>>, vector<8x128xf32>
      tpu.vector_store %arg5[%c0_17, %c0_18], %15 {strides = array<i32>} : memref<8x128xf32, #tpu.memory_space<vmem>>, vector<8x128xf32>,
      %29 = vector.broadcast %27 : vector<8x1xf32> to vector<8x128xf32>
      %30 = arith.mulf %20, %29 : vector<8x128xf32>
      %c0_19 = arith.constant 0 : index
      %c0_20 = arith.constant 0 : index
      %31 = vector.load %arg6[%c0_19, %c0_20] : memref<8x128xf32, #tpu.memory_space<vmem>>, vector<8x128xf32>
      tpu.vector_store %arg6[%c0_19, %c0_20], %30 {strides = array<i32>} : memref<8x128xf32, #tpu.memory_space<vmem>>, vector<8x128xf32>,
    } else {
    }
    return
  }
  func.func @transform_0(%arg0: i32, %arg1: i32) -> (i32, i32) {
    %c0_i32 = arith.constant 0 : i32
    return %arg0, %arg1 : i32, i32
  }
  func.func @transform_1(%arg0: i32, %arg1: i32) -> (i32, i32) {
    %c0_i32 = arith.constant 0 : i32
    %c0_i32_0 = arith.constant 0 : i32
    return %arg1, %c0_i32 : i32, i32
  }
  func.func @transform_2(%arg0: i32, %arg1: i32) -> (i32, i32) {
    %c0_i32 = arith.constant 0 : i32
    %c0_i32_0 = arith.constant 0 : i32
    %c0_i32_1 = arith.constant 0 : i32
    return %c0_i32, %c0_i32_0 : i32, i32
  }
  func.func @transform_3(%arg0: i32, %arg1: i32) -> (i32, i32) {
    %c0_i32 = arith.constant 0 : i32
    %c0_i32_0 = arith.constant 0 : i32
    return %arg0, %c0_i32 : i32, i32
  }
  func.func @transform_4(%arg0: i32, %arg1: i32) -> (i32, i32) {
    %c0_i32 = arith.constant 0 : i32
    %c0_i32_0 = arith.constant 0 : i32
    return %arg0, %c0_i32 : i32, i32
  }
}

</mosaic_0001>

<llo_original>
// kernel: tpu_custom_call.1
$region0: #{tpu_custom_call.1}
  #allocation0 [shape = 'u32[]', space=smem, size = 0x4, offset = 0x4, fixed_abs, tag = 'smem constant byte address 0x4 - core index']
  #allocation1 [shape = 'u32[144,128]{1,0:T(1,128)}', space=vmem, size = 0x12000, scoped, tag = 'internal scratch']
  #allocation2 [shape = 'f32[8,128]{1,0:T(8,128)}', space=vmem, size = 0x1000, scoped, tag = 'scratch operand']
  %s0 = inlined_call_operand.vmem [shape: bf16[8,4], index: 0, kind: input, shape index: {}]
  %s1 = inlined_call_operand.vmem [shape: bf16[4,128], index: 1, kind: input, shape index: {}]
  %s2 = inlined_call_operand.vmem [shape: f32[1,128], index: 2, kind: input, shape index: {}]
  %s3 = inlined_call_operand.hbm [shape: f32[8,128], index: 3, kind: output, shape index: {0}]
  %s4 = inlined_call_operand.hbm [shape: f32[8,128], index: 4, kind: output, shape index: {1}]
  %5 = xla_tuple %s3, %s4
  %s6 = sld [smem:[#allocation0]]
  $region38: #{tpu_custom_call.1} parent=0
    _
  %s8 = ssub.s32 1, %s6
  %s9 = scalar_select 0, %s8, %s6
  $region1: #{tpu_custom_call.1} parent=0
    #allocation3 [shape = 'u8[4096]{0}', space=vmem, size = 0x1000, scoped, tag = 'output window, operand 0, single buffered']
    #allocation4 [shape = 's32[1]{0}', space=sflag, size = 0x4, scoped, tag = 'scoped memory for tpu_custom_call.1']
    #allocation5 [shape = 'u8[4096]{0}', space=vmem, size = 0x1000, scoped, tag = 'output window, operand 1, single buffered']
    #allocation6 [shape = 's32[1]{0}', space=sflag, size = 0x4, scoped, tag = 'scoped memory for tpu_custom_call.1']
    %10 = vsyncpa [#allocation4], 0
    %11 = vsyncpa [#allocation6], 0
    // Predicated region
    $region2: #{tpu_custom_call.1} parent=1 // pred_check
      _
    $region3: #{tpu_custom_call.1} parent=1 // pred_check_branch
      %13 = sbr.rel (0) target = $region5
    $region4: #{tpu_custom_call.1} parent=1 // pred_region
      _
    $region5: #{tpu_custom_call.1} parent=1 // pred_fallthru
      _
    // Predicated region
    $region6: #{tpu_custom_call.1} parent=1 // pred_check
      _
    $region7: #{tpu_custom_call.1} parent=1 // pred_check_branch
      %15 = sbr.rel (0) target = $region9
    $region8: #{tpu_custom_call.1} parent=1 // pred_region
      _
    $region9: #{tpu_custom_call.1} parent=1 // pred_fallthru
      _
    // Predicated region
    $region10: #{tpu_custom_call.1} parent=1 // pred_check
      _
    $region11: #{tpu_custom_call.1} parent=1 // pred_check_branch
      %17 = sbr.rel (0) target = $region13
    $region12: #{tpu_custom_call.1} parent=1 // pred_region
      _
    $region13: #{tpu_custom_call.1} parent=1 // pred_fallthru
      _
    %p19 = scmp.eq.s32.totalorder 0, 0
    // Predicated region
    $region14: #{tpu_custom_call.1} parent=1 // pred_check
      %p20 = pneg %p19
    $region15: #{tpu_custom_call.1} parent=1 // pred_check_branch
      %22 = sbr.rel (%p20) target = $region17
    $region16: #{tpu_custom_call.1} parent=1 // pred_region
      %23 = vst [vmem:[#allocation2] sm:$0xff] 0.0
    $region17: #{tpu_custom_call.1} parent=1 // pred_fallthru
      _
    %v24 = vld [vmem:[#allocation2] sm:$0xff]
    %v25 = vld [vmem:[%s0] sm:$0xf]
    %v26 = vld [vmem:[%s1] sm:$0x3]
    %vm27 = vcmask 31744
    %v29 = vsel %vm27, %v25, 0
    %vm31 = vcmask 1041408
    %v33 = vsel %vm31, %v26, 0
    %35 = vmatprep.subr.bf16.mxu0 0
    %36 = vmatpush1.bf16.msra.mxu0 %v33
    %37 = vmatprep.subr.bf16.mxu0 0
    %38 = vmatpush1.bf16.msra.mxu0 0
    %39 = vmatprep.subr.bf16.mxu0 0
    %40 = vmatpush1.bf16.msra.mxu0 0
    %41 = vmatprep.subr.bf16.mxu0 0
    %42 = vmatpush1.bf16.msra.mxu0 0
    %43 = vmatprep.subr.bf16.mxu0 0
    %44 = vmatpush1.bf16.msra.mxu0 0
    %45 = vmatprep.subr.bf16.mxu0 0
    %46 = vmatpush1.bf16.msra.mxu0 0
    %47 = vmatprep.subr.bf16.mxu0 0
    %48 = vmatpush1.bf16.msra.mxu0 0
    %49 = vmatprep.subr.bf16.mxu0 0
    %50 = vmatpush1.bf16.msra.mxu0 0
    %51 = vmatprep.subr.bf16.mxu0 0
    %52 = vmatpush1.bf16.msra.mxu0 0
    %53 = vmatprep.subr.bf16.mxu0 0
    %54 = vmatpush1.bf16.msra.mxu0 0
    %55 = vmatprep.subr.bf16.mxu0 0
    %56 = vmatpush1.bf16.msra.mxu0 0
    %57 = vmatprep.subr.bf16.mxu0 0
    %58 = vmatpush1.bf16.msra.mxu0 0
    %59 = vmatprep.subr.bf16.mxu0 0
    %60 = vmatpush1.bf16.msra.mxu0 0
    %61 = vmatprep.subr.bf16.mxu0 0
    %62 = vmatpush1.bf16.msra.mxu0 0
    %63 = vmatprep.subr.bf16.mxu0 0
    %64 = vmatpush1.bf16.msra.mxu0 0
    %65 = vmatprep.subr.bf16.mxu0 0
    %66 = vmatpush1.bf16.msra.mxu0 0
    %67 = vmatprep.mubr.bf16.mxu0 0
    %68 = vmatmul.mubr.bf16.gmra.mrb[0].mxu0 %v29
    %v69 = vpop.f32.mrb[0].mxu0
    %v70 = vadd.f32 0.0, %v69
    %v71 = vpop.f32.mrb[0].mxu0
    %v72 = vpop.f32.mrb[0].mxu0
    %v73 = vpop.f32.mrb[0].mxu0
    %74 = vdwg.mxu0
    %v75 = vadd.f32 %v24, %v70
    %76 = vst [vmem:[#allocation2] sm:$0xff] %v75
    // Predicated region
    $region18: #{tpu_custom_call.1} parent=1 // pred_check
      %p77 = pneg %p19
    $region19: #{tpu_custom_call.1} parent=1 // pred_check_branch
      %79 = sbr.rel (%p77) target = $region21
    $region20: #{tpu_custom_call.1} parent=1 // pred_region
      %v80 = vld [vmem:[#allocation2] sm:$0xff]
      %v81 = vld [vmem:[%s2] sm:$0x1]
      %v83 = vlaneseq
      %v84 = vshrl.u32 %v83, 7
      %v85 = vsub.s32 0, %v84
      %v86 = vrot.slane %v81, %v85
      %v88 = vadd.f32 %v80, %v86
      %89 = vmax.xlane.f32.xlu0 %v88
      %v90 = vpop.xlane.xlu0 %89
      %v91 = vsub.f32 %v88, %v90
      %v92 = vmul.f32 %v91, 1.442695
      %v93 = vpow.pop %v92
      %94 = vadd.xlane.f32.xlu0 %v93
      %v95 = vpop.xlane.xlu0 %94
      %v96 = vrcp.pop %v95
      %v97 = vmul.f32 %v95, %v96
      %v98 = vsub.f32 2.0, %v97
      %v99 = vmul.f32 %v96, %v98
      %100 = vst [vmem:[#allocation3] sm:$0xff] %v88
      %v101 = vmul.f32 %v93, %v99
      %102 = vst [vmem:[#allocation5] sm:$0xff] %v101
    $region21: #{tpu_custom_call.1} parent=1 // pred_fallthru
      _
    // Predicated region
    $region22: #{tpu_custom_call.1} parent=1 // pred_check
      _
    $region23: #{tpu_custom_call.1} parent=1 // pred_check_branch
      %104 = sbr.rel (0) target = $region25
    $region24: #{tpu_custom_call.1} parent=1 // pred_region
      %s106 = ssub.s32 128, 128
      %107 = vsyncadd [#allocation4], %s106
      %s109 = sshll.u32 [#allocation3], 4
      %s110 = int_to_ptr.vmem [resolvable:$true] %s109
      %112 = dma.vmem_to_hbm [thread:$0]  %s110, 128, %s3, [#allocation4]
    $region25: #{tpu_custom_call.1} parent=1 // pred_fallthru
      _
    // Predicated region
    $region26: #{tpu_custom_call.1} parent=1 // pred_check
      _
    $region27: #{tpu_custom_call.1} parent=1 // pred_check_branch
      %114 = sbr.rel (0) target = $region29
    $region28: #{tpu_custom_call.1} parent=1 // pred_region
      %s116 = ssub.s32 128, 128
      %117 = vsyncadd [#allocation6], %s116
      %s119 = sshll.u32 [#allocation5], 4
      %s120 = int_to_ptr.vmem [resolvable:$true] %s119
      %122 = dma.vmem_to_hbm [thread:$0]  %s120, 128, %s4, [#allocation6]
    $region29: #{tpu_custom_call.1} parent=1 // pred_fallthru
      _
    // Predicated region
    $region30: #{tpu_custom_call.1} parent=1 // pred_check
      _
    $region31: #{tpu_custom_call.1} parent=1 // pred_check_branch
      %124 = sbr.rel (0) target = $region33
    $region32: #{tpu_custom_call.1} parent=1 // pred_region
      %125 = dma.done [#allocation4], 128
    $region33: #{tpu_custom_call.1} parent=1 // pred_fallthru
      _
    // Predicated region
    $region34: #{tpu_custom_call.1} parent=1 // pred_check
      _
    $region35: #{tpu_custom_call.1} parent=1 // pred_check_branch
      %127 = sbr.rel (0) target = $region37
    $region36: #{tpu_custom_call.1} parent=1 // pred_region
      %128 = dma.done [#allocation6], 128
    $region37: #{tpu_custom_call.1} parent=1 // pred_fallthru
      _
    %129 = vsyncpa [#allocation4], 1
    %130 = vsyncpa [#allocation6], 1

</llo_original>
